<compile_context>
chip_gen: v5e
topology: v5e:2x2
jax: 0.10.0
libtpu: 0.0.40
codegen_flags: <defaults>
</compile_context>

<pallas_src>
import math

import jax
import jax.numpy as jnp
from jax.experimental import pallas as pl
from jax.experimental.pallas import tpu as pltpu


def _round_up(x, m):
    return ((x + m - 1) // m) * m


# ----------------------------------------------------------------------------
# Kernel: one batch tile, all heads fused. Three lane-dense matmuls + 2 ReLUs.
# ----------------------------------------------------------------------------
def _fused_multi_mlp_kernel(obs_ref, w1_ref, w2_ref, w3_ref, out_ref):
    x = obs_ref[...]                                        # (TB, K1)
    h = jnp.dot(x, w1_ref[...], preferred_element_type=jnp.float32)
    h = jnp.maximum(h, 0.0)                                 # ReLU (bias lane = 1 survives)
    h = jnp.dot(h, w2_ref[...], preferred_element_type=jnp.float32)
    h = jnp.maximum(h, 0.0)
    out_ref[...] = jnp.dot(h, w3_ref[...], preferred_element_type=jnp.float32)


# ----------------------------------------------------------------------------
# Packing: per-head weights -> concatenated / block-diagonal, biases folded in.
# Runs once at init time (host/XLA), not inside the kernel.
# ----------------------------------------------------------------------------
def pack_params(params):
    w1, b1 = params["w1"], params["b1"]      # (r, obs_dim, h1), (r, 1, h1)
    w2, b2 = params["w2"], params["b2"]      # (r, h1, h2),      (r, 1, h2)
    w3, b3 = params["w3"], params["b3"]      # (r, h2, act_dim), (r, 1, act_dim)
    r_dim, obs_dim, h1 = w1.shape
    _, _, h2 = w2.shape
    _, _, act_dim = w3.shape

    K1 = _round_up(obs_dim + 1, 128)         # obs features + ones column, lane padded
    H1 = _round_up(r_dim * h1 + 1, 128)      # fused hidden1 + bias lane, lane padded
    H2 = _round_up(r_dim * h2 + 1, 128)      # fused hidden2 + bias lane, lane padded
    AO = _round_up(r_dim * act_dim, 128)     # fused output, lane padded

    bias1 = r_dim * h1                       # bias-lane column in fused hidden1
    bias2 = r_dim * h2                       # bias-lane column in fused hidden2

    W1p = jnp.zeros((K1, H1), jnp.float32)
    W2p = jnp.zeros((H1, H2), jnp.float32)
    W3p = jnp.zeros((H2, AO), jnp.float32)
    for r in range(r_dim):
        W1p = W1p.at[:obs_dim, r * h1:(r + 1) * h1].set(w1[r])
        W1p = W1p.at[obs_dim, r * h1:(r + 1) * h1].set(b1[r, 0])      # bias via ones col
        W2p = W2p.at[r * h1:(r + 1) * h1, r * h2:(r + 1) * h2].set(w2[r])
        W2p = W2p.at[bias1, r * h2:(r + 1) * h2].set(b2[r, 0])        # bias via bias lane
        # Output columns interleaved as a*r_dim + r so the fused output already
        # matches torch.stack(..., -1) after a plain reshape (no transpose).
        cols = jnp.arange(act_dim) * r_dim + r
        W3p = W3p.at[r * h2:(r + 1) * h2, cols].set(w3[r])
        W3p = W3p.at[bias2, cols].set(b3[r, 0])
    # Propagate the constant 1.0 of the ones column through the bias lanes.
    W1p = W1p.at[obs_dim, bias1].set(1.0)
    W2p = W2p.at[bias1, bias2].set(1.0)

    meta = dict(obs_dim=obs_dim, act_dim=act_dim, r_dim=r_dim,
                K1=K1, H1=H1, H2=H2, AO=AO)
    return (W1p, W2p, W3p), meta


# ----------------------------------------------------------------------------
# Wrapper: pad batch, augment obs with the ones column, run, un-pack layout.
# ----------------------------------------------------------------------------
def multi_mlp_q_forward(obs, packed, meta):
    W1p, W2p, W3p = packed
    obs = obs.astype(jnp.float32)
    B, obs_dim = obs.shape
    K1, H1, H2, AO = meta["K1"], meta["H1"], meta["H2"], meta["AO"]
    r_dim, act_dim = meta["r_dim"], meta["act_dim"]

    # Batch tile: up to 512 rows per grid step (amortizes per-step overhead),
    # sublane (8) aligned; single step when B is small.
    if B <= 512:
        TB = _round_up(max(B, 8), 8)
        B_pad = TB
    else:
        TB = 512
        B_pad = _round_up(B, TB)

    # obs padded to (B_pad, K1) with a constant ones column at index obs_dim.
    obs_aug = jnp.zeros((B_pad, K1), jnp.float32)
    obs_aug = obs_aug.at[:B, :obs_dim].set(obs)
    obs_aug = obs_aug.at[:, obs_dim].set(1.0)

    out = pl.pallas_call(
        _fused_multi_mlp_kernel,
        out_shape=jax.ShapeDtypeStruct((B_pad, AO), jnp.float32),
        grid_spec=pltpu.PrefetchScalarGridSpec(
            num_scalar_prefetch=0,
            grid=(B_pad // TB,),
            in_specs=[
                pl.BlockSpec((TB, K1), lambda i: (i, 0)),   # obs tile (varies with i)
                pl.BlockSpec((K1, H1), lambda i: (0, 0)),   # packed W1 (resident)
                pl.BlockSpec((H1, H2), lambda i: (0, 0)),   # packed W2 (resident)
                pl.BlockSpec((H2, AO), lambda i: (0, 0)),   # packed W3 (resident)
            ],
            out_specs=pl.BlockSpec((TB, AO), lambda i: (i, 0)),  # lane-dense output
        ),
        compiler_params=pltpu.CompilerParams(
            dimension_semantics=("parallel",)),
    )(obs_aug, W1p, W2p, W3p)

    # Columns are already in stack(..., -1) order: index = a * r_dim + r.
    q = out[:B, :act_dim * r_dim].reshape(B, act_dim, r_dim)
    return q


# ----------------------------------------------------------------------------
# Init + plain-JAX reference (mirrors the PyTorch module) for validation.
# ----------------------------------------------------------------------------
def init_params(key, obs_dim, act_dim, hidden_sizes, r_dim):
    """Deterministic init mimicking nn.Linear's U(-1/sqrt(fan_in), +1/sqrt(fan_in))."""
    h1, h2 = hidden_sizes
    sizes = [(obs_dim, h1), (h1, h2), (h2, act_dim)]
    params = {}
    keys = jax.random.split(key, 6)
    for i, (fan_in, fan_out) in enumerate(sizes):
        bound = 1.0 / math.sqrt(fan_in)
        w = jax.random.uniform(keys[2 * i], (r_dim, fan_in, fan_out),
                               jnp.float32, -bound, bound)
        b = jax.random.uniform(keys[2 * i + 1], (r_dim, 1, fan_out),
                               jnp.float32, -bound, bound)
        params[f"w{i + 1}"] = w
        params[f"b{i + 1}"] = b
    return params


def reference_forward(obs, params):
    outs = []
    r_dim = params["w1"].shape[0]
    for r in range(r_dim):
        h = jnp.maximum(obs @ params["w1"][r] + params["b1"][r][0], 0.0)
        h = jnp.maximum(h @ params["w2"][r] + params["b2"][r][0], 0.0)
        outs.append(h @ params["w3"][r] + params["b3"][r][0])
    return jnp.stack(outs, axis=-1)


if __name__ == "__main__":
    # Small shapes consistent with the module's forward.
    B, obs_dim, act_dim, r_dim = 8, 16, 4, 3
    hidden_sizes = (32, 32)

    key = jax.random.PRNGKey(0)
    k_obs, k_par = jax.random.split(key)
    obs = jax.random.normal(k_obs, (B, obs_dim), jnp.float32)
    params = init_params(k_par, obs_dim, act_dim, hidden_sizes, r_dim)

    packed, meta = pack_params(params)
    q = multi_mlp_q_forward(obs, packed, meta)
    q = jax.block_until_ready(q)

    q_ref = reference_forward(obs, params)
    assert q.shape == (B, act_dim, r_dim), q.shape
    assert jnp.allclose(q, q_ref, atol=1e-5, rtol=1e-5), "mismatch vs reference"

    print("KERNEL_OK")
</pallas_src>

<mosaic_0001>
module attributes {stable_mosaic.version = 11 : i64} {
  func.func @_fused_multi_mlp_kernel(%arg0: i32, %arg1: memref<8x128xf32, #tpu.memory_space<vmem>>, %arg2: memref<128x128xf32, #tpu.memory_space<vmem>>, %arg3: memref<128x128xf32, #tpu.memory_space<vmem>>, %arg4: memref<128x128xf32, #tpu.memory_space<vmem>>, %arg5: memref<8x128xf32, #tpu.memory_space<vmem>>) attributes {dimension_semantics = [#tpu.dimension_semantics<parallel>], iteration_bounds = array<i64: 1>, scalar_prefetch = 0 : i64, scratch_operands = 0 : i64, tpu.core_type = #tpu.core_type<tc>, window_params = [{transform_indices = @transform_0, window_bounds = array<i64: 8, 128>}, {pipeline_mode = #tpu.pipeline_mode<synchronous>, transform_indices = @transform_1, window_bounds = array<i64: 128, 128>}, {pipeline_mode = #tpu.pipeline_mode<synchronous>, transform_indices = @transform_2, window_bounds = array<i64: 128, 128>}, {pipeline_mode = #tpu.pipeline_mode<synchronous>, transform_indices = @transform_3, window_bounds = array<i64: 128, 128>}, {transform_indices = @transform_4, window_bounds = array<i64: 8, 128>}]} {
    %c0 = arith.constant 0 : index
    %c0_0 = arith.constant 0 : index
    %0 = vector.load %arg1[%c0, %c0_0] : memref<8x128xf32, #tpu.memory_space<vmem>>, vector<8x128xf32>
    %c0_1 = arith.constant 0 : index
    %c0_2 = arith.constant 0 : index
    %1 = vector.load %arg2[%c0_1, %c0_2] : memref<128x128xf32, #tpu.memory_space<vmem>>, vector<128x128xf32>
    %cst = arith.constant dense<0.000000e+00> : vector<8x128xf32>
    %2 = tpu.matmul %0, %1, %cst {dimension_numbers = #tpu.dot_dimension_numbers<[1], [0], [0], [1], [0, 0, 1, 1], [], []>} : vector<8x128xf32>, vector<128x128xf32>, vector<8x128xf32> -> vector<8x128xf32>
    %cst_3 = arith.constant 0.000000e+00 : f32
    %3 = vector.broadcast %cst_3 : f32 to vector<8x128xf32>
    %4 = arith.maximumf %2, %3 : vector<8x128xf32>
    %c0_4 = arith.constant 0 : index
    %c0_5 = arith.constant 0 : index
    %5 = vector.load %arg3[%c0_4, %c0_5] : memref<128x128xf32, #tpu.memory_space<vmem>>, vector<128x128xf32>
    %cst_6 = arith.constant dense<0.000000e+00> : vector<8x128xf32>
    %6 = tpu.matmul %4, %5, %cst_6 {dimension_numbers = #tpu.dot_dimension_numbers<[1], [0], [0], [1], [0, 0, 1, 1], [], []>} : vector<8x128xf32>, vector<128x128xf32>, vector<8x128xf32> -> vector<8x128xf32>
    %cst_7 = arith.constant 0.000000e+00 : f32
    %7 = vector.broadcast %cst_7 : f32 to vector<8x128xf32>
    %8 = arith.maximumf %6, %7 : vector<8x128xf32>
    %c0_8 = arith.constant 0 : index
    %c0_9 = arith.constant 0 : index
    %9 = vector.load %arg4[%c0_8, %c0_9] : memref<128x128xf32, #tpu.memory_space<vmem>>, vector<128x128xf32>
    %cst_10 = arith.constant dense<0.000000e+00> : vector<8x128xf32>
    %10 = tpu.matmul %8, %9, %cst_10 {dimension_numbers = #tpu.dot_dimension_numbers<[1], [0], [0], [1], [0, 0, 1, 1], [], []>} : vector<8x128xf32>, vector<128x128xf32>, vector<8x128xf32> -> vector<8x128xf32>
    %c0_11 = arith.constant 0 : index
    %c0_12 = arith.constant 0 : index
    %11 = vector.load %arg5[%c0_11, %c0_12] : memref<8x128xf32, #tpu.memory_space<vmem>>, vector<8x128xf32>
    tpu.vector_store %arg5[%c0_11, %c0_12], %10 {strides = array<i32>} : memref<8x128xf32, #tpu.memory_space<vmem>>, vector<8x128xf32>,
    return
  }
  func.func @transform_0(%arg0: i32) -> (i32, i32) {
    %c0_i32 = arith.constant 0 : i32
    %c0_i32_0 = arith.constant 0 : i32
    return %arg0, %c0_i32 : i32, i32
  }
  func.func @transform_1(%arg0: i32) -> (i32, i32) {
    %c0_i32 = arith.constant 0 : i32
    %c0_i32_0 = arith.constant 0 : i32
    %c0_i32_1 = arith.constant 0 : i32
    return %c0_i32, %c0_i32_0 : i32, i32
  }
  func.func @transform_2(%arg0: i32) -> (i32, i32) {
    %c0_i32 = arith.constant 0 : i32
    %c0_i32_0 = arith.constant 0 : i32
    %c0_i32_1 = arith.constant 0 : i32
    return %c0_i32, %c0_i32_0 : i32, i32
  }
  func.func @transform_3(%arg0: i32) -> (i32, i32) {
    %c0_i32 = arith.constant 0 : i32
    %c0_i32_0 = arith.constant 0 : i32
    %c0_i32_1 = arith.constant 0 : i32
    return %c0_i32, %c0_i32_0 : i32, i32
  }
  func.func @transform_4(%arg0: i32) -> (i32, i32) {
    %c0_i32 = arith.constant 0 : i32
    %c0_i32_0 = arith.constant 0 : i32
    return %arg0, %c0_i32 : i32, i32
  }
}

</mosaic_0001>

<llo_original>
// kernel: tpu_custom_call.1
$region0: #{tpu_custom_call.1}
  #allocation0 [shape = 'u32[]', space=smem, size = 0x4, offset = 0x4, fixed_abs, tag = 'smem constant byte address 0x4 - core index']
  #allocation1 [shape = 'u32[72,128]{1,0:T(1,128)}', space=vmem, size = 0x9000, scoped, tag = 'internal scratch']
  %s0 = inlined_call_operand.hbm [shape: f32[8,128], index: 0, kind: input, shape index: {}]
  %s1 = inlined_call_operand.hbm [shape: f32[128,128], index: 1, kind: input, shape index: {}]
  %s2 = inlined_call_operand.hbm [shape: f32[128,128], index: 2, kind: input, shape index: {}]
  %s3 = inlined_call_operand.hbm [shape: f32[128,128], index: 3, kind: input, shape index: {}]
  %s4 = inlined_call_operand.hbm [shape: f32[8,128], index: 4, kind: output, shape index: {}]
  %s5 = sld [smem:[#allocation0]]
  $region42: #{tpu_custom_call.1} parent=0
    _
  %s7 = ssub.s32 1, %s5
  %s8 = scalar_select 0, %s7, %s5
  $region1: #{tpu_custom_call.1} parent=0
    #allocation2 [shape = 'u8[4096]{0}', space=vmem, size = 0x1000, scoped, tag = 'input window, operand 0, single buffered']
    #allocation3 [shape = 's32[1]{0}', space=sflag, size = 0x4, scoped, tag = 'scoped memory for tpu_custom_call.1']
    #allocation4 [shape = 's32[1]{0}', space=sflag, size = 0x4, scoped, tag = 'scoped memory for tpu_custom_call.1']
    #allocation5 [shape = 'u8[65536]{0}', space=vmem, size = 0x10000, scoped, tag = 'input window, operand 1, single buffered']
    #allocation6 [shape = 's32[1]{0}', space=sflag, size = 0x4, scoped, tag = 'scoped memory for tpu_custom_call.1']
    #allocation7 [shape = 'u8[65536]{0}', space=vmem, size = 0x10000, scoped, tag = 'input window, operand 2, single buffered']
    #allocation8 [shape = 'u8[65536]{0}', space=vmem, size = 0x10000, scoped, tag = 'input window, operand 3, single buffered']
    #allocation9 [shape = 's32[1]{0}', space=sflag, size = 0x4, scoped, tag = 'scoped memory for tpu_custom_call.1']
    #allocation10 [shape = 'u8[4096]{0}', space=vmem, size = 0x1000, scoped, tag = 'output window, operand 0, single buffered']
    %9 = vsyncpa [#allocation3], 0
    %10 = vsyncpa [#allocation6], 0
    %11 = vsyncpa [#allocation9], 0
    %12 = vsyncpa [#allocation4], 0
    // Predicated region
    $region2: #{tpu_custom_call.1} parent=1 // pred_check
      _
    $region3: #{tpu_custom_call.1} parent=1 // pred_check_branch
      %14 = sbr.rel (0) target = $region5
    $region4: #{tpu_custom_call.1} parent=1 // pred_region
      %16 = vsyncadd [#allocation3], 0
      %s18 = sshll.u32 %s0, 4
      %s19 = int_to_ptr.hbm [resolvable:$true] %s18
      %s20 = sshll.u32 [#allocation2], 4
      %s21 = int_to_ptr.vmem [resolvable:$true] %s20
      %23 = dma.hbm_to_vmem [thread:$0]  %s19, 128, %s21, [#allocation3]
    $region5: #{tpu_custom_call.1} parent=1 // pred_fallthru
      _
    // Predicated region
    $region6: #{tpu_custom_call.1} parent=1 // pred_check
      _
    $region7: #{tpu_custom_call.1} parent=1 // pred_check_branch
      %25 = sbr.rel (0) target = $region9
    $region8: #{tpu_custom_call.1} parent=1 // pred_region
      %27 = vsyncadd [#allocation6], 0
      %s28 = sshll.u32 %s1, 4
      %s29 = int_to_ptr.hbm [resolvable:$true] %s28
      %s30 = sshll.u32 [#allocation5], 4
      %s31 = int_to_ptr.vmem [resolvable:$true] %s30
      %36 = dma.hbm_to_vmem [thread:$0]  %s29, 2048, %s31, [#allocation6], 128, 128, 8
    $region9: #{tpu_custom_call.1} parent=1 // pred_fallthru
      _
    // Predicated region
    $region10: #{tpu_custom_call.1} parent=1 // pred_check
      _
    $region11: #{tpu_custom_call.1} parent=1 // pred_check_branch
      %38 = sbr.rel (0) target = $region13
    $region12: #{tpu_custom_call.1} parent=1 // pred_region
      %40 = vsyncadd [#allocation6], 0
      %s41 = sshll.u32 %s2, 4
      %s42 = int_to_ptr.hbm [resolvable:$true] %s41
      %s43 = sshll.u32 [#allocation7], 4
      %s44 = int_to_ptr.vmem [resolvable:$true] %s43
      %49 = dma.hbm_to_vmem [thread:$0]  %s42, 2048, %s44, [#allocation6], 128, 128, 8
    $region13: #{tpu_custom_call.1} parent=1 // pred_fallthru
      _
    // Predicated region
    $region14: #{tpu_custom_call.1} parent=1 // pred_check
      _
    $region15: #{tpu_custom_call.1} parent=1 // pred_check_branch
      %51 = sbr.rel (0) target = $region17
    $region16: #{tpu_custom_call.1} parent=1 // pred_region
      %53 = vsyncadd [#allocation9], 0
      %s54 = sshll.u32 %s3, 4
      %s55 = int_to_ptr.hbm [resolvable:$true] %s54
      %s56 = sshll.u32 [#allocation8], 4
      %s57 = int_to_ptr.vmem [resolvable:$true] %s56
      %62 = dma.hbm_to_vmem [thread:$0]  %s55, 2048, %s57, [#allocation9], 128, 128, 8
    $region17: #{tpu_custom_call.1} parent=1 // pred_fallthru
      _
    // Predicated region
    $region18: #{tpu_custom_call.1} parent=1 // pred_check
      _
    $region19: #{tpu_custom_call.1} parent=1 // pred_check_branch
      %64 = sbr.rel (0) target = $region21
    $region20: #{tpu_custom_call.1} parent=1 // pred_region
      %66 = dma.done [#allocation3], 128
    $region21: #{tpu_custom_call.1} parent=1 // pred_fallthru
      _
    // Predicated region
    $region22: #{tpu_custom_call.1} parent=1 // pred_check
      _
    $region23: #{tpu_custom_call.1} parent=1 // pred_check_branch
      %68 = sbr.rel (0) target = $region25
    $region24: #{tpu_custom_call.1} parent=1 // pred_region
      %70 = dma.done [#allocation6], 2048
    $region25: #{tpu_custom_call.1} parent=1 // pred_fallthru
      _
    // Predicated region
    $region26: #{tpu_custom_call.1} parent=1 // pred_check
      _
    $region27: #{tpu_custom_call.1} parent=1 // pred_check_branch
      %72 = sbr.rel (0) target = $region29
    $region28: #{tpu_custom_call.1} parent=1 // pred_region
      %74 = dma.done [#allocation6], 2048
    $region29: #{tpu_custom_call.1} parent=1 // pred_fallthru
      _
    // Predicated region
    $region30: #{tpu_custom_call.1} parent=1 // pred_check
      _
    $region31: #{tpu_custom_call.1} parent=1 // pred_check_branch
      %76 = sbr.rel (0) target = $region33
    $region32: #{tpu_custom_call.1} parent=1 // pred_region
      %78 = dma.done [#allocation9], 2048
    $region33: #{tpu_custom_call.1} parent=1 // pred_fallthru
      _
    %v79 = vld [vmem:[#allocation2] sm:$0xff]
    %v80 = vld [vmem:[#allocation5] sm:$0xff]
    %v81 = vld [vmem:[#allocation5 + $0x8] sm:$0xff]
    %v82 = vld [vmem:[#allocation5 + $0x10] sm:$0xff]
    %v83 = vld [vmem:[#allocation5 + $0x18] sm:$0xff]
    %v84 = vld [vmem:[#allocation5 + $0x20] sm:$0xff]
    %v85 = vld [vmem:[#allocation5 + $0x28] sm:$0xff]
    %v86 = vld [vmem:[#allocation5 + $0x30] sm:$0xff]
    %v87 = vld [vmem:[#allocation5 + $0x38] sm:$0xff]
    %v88 = vld [vmem:[#allocation5 + $0x40] sm:$0xff]
    %v89 = vld [vmem:[#allocation5 + $0x48] sm:$0xff]
    %v90 = vld [vmem:[#allocation5 + $0x50] sm:$0xff]
    %v91 = vld [vmem:[#allocation5 + $0x58] sm:$0xff]
    %v92 = vld [vmem:[#allocation5 + $0x60] sm:$0xff]
    %v93 = vld [vmem:[#allocation5 + $0x68] sm:$0xff]
    %v94 = vld [vmem:[#allocation5 + $0x70] sm:$0xff]
    %v95 = vld [vmem:[#allocation5 + $0x78] sm:$0xff]
    %96 = vmatpush.msra.mxu0 %v95
    %97 = vmatpush.msra.mxu0 %v94
    %98 = vmatpush.msra.mxu0 %v93
    %99 = vmatpush.msra.mxu0 %v92
    %100 = vmatpush.msra.mxu0 %v91
    %101 = vmatpush.msra.mxu0 %v90
    %102 = vmatpush.msra.mxu0 %v89
    %103 = vmatpush.msra.mxu0 %v88
    %104 = vmatpush.msra.mxu0 %v87
    %105 = vmatpush.msra.mxu0 %v86
    %106 = vmatpush.msra.mxu0 %v85
    %107 = vmatpush.msra.mxu0 %v84
    %108 = vmatpush.msra.mxu0 %v83
    %109 = vmatpush.msra.mxu0 %v82
    %110 = vmatpush.msra.mxu0 %v81
    %111 = vmatpush.msra.mxu0 %v80
    %112 = vmatmul.f32.gmra.mxu0 %v79
    %v113 = vpop.f32.mrf.mxu0
    %v114 = vadd.f32 0.0, %v113
    %115 = vdwg.mxu0
    %v116 = vmax.f32 %v114, 0.0
    %v117 = vld [vmem:[#allocation7] sm:$0xff]
    %v118 = vld [vmem:[#allocation7 + $0x8] sm:$0xff]
    %v119 = vld [vmem:[#allocation7 + $0x10] sm:$0xff]
    %v120 = vld [vmem:[#allocation7 + $0x18] sm:$0xff]
    %v121 = vld [vmem:[#allocation7 + $0x20] sm:$0xff]
    %v122 = vld [vmem:[#allocation7 + $0x28] sm:$0xff]
    %v123 = vld [vmem:[#allocation7 + $0x30] sm:$0xff]
    %v124 = vld [vmem:[#allocation7 + $0x38] sm:$0xff]
    %v125 = vld [vmem:[#allocation7 + $0x40] sm:$0xff]
    %v126 = vld [vmem:[#allocation7 + $0x48] sm:$0xff]
    %v127 = vld [vmem:[#allocation7 + $0x50] sm:$0xff]
    %v128 = vld [vmem:[#allocation7 + $0x58] sm:$0xff]
    %v129 = vld [vmem:[#allocation7 + $0x60] sm:$0xff]
    %v130 = vld [vmem:[#allocation7 + $0x68] sm:$0xff]
    %v131 = vld [vmem:[#allocation7 + $0x70] sm:$0xff]
    %v132 = vld [vmem:[#allocation7 + $0x78] sm:$0xff]
    %133 = vmatpush.msra.mxu0 %v132
    %134 = vmatpush.msra.mxu0 %v131
    %135 = vmatpush.msra.mxu0 %v130
    %136 = vmatpush.msra.mxu0 %v129
    %137 = vmatpush.msra.mxu0 %v128
    %138 = vmatpush.msra.mxu0 %v127
    %139 = vmatpush.msra.mxu0 %v126
    %140 = vmatpush.msra.mxu0 %v125
    %141 = vmatpush.msra.mxu0 %v124
    %142 = vmatpush.msra.mxu0 %v123
    %143 = vmatpush.msra.mxu0 %v122
    %144 = vmatpush.msra.mxu0 %v121
    %145 = vmatpush.msra.mxu0 %v120
    %146 = vmatpush.msra.mxu0 %v119
    %147 = vmatpush.msra.mxu0 %v118
    %148 = vmatpush.msra.mxu0 %v117
    %149 = vmatmul.f32.gmra.mxu0 %v116
    %v150 = vpop.f32.mrf.mxu0
    %v151 = vadd.f32 0.0, %v150
    %152 = vdwg.mxu0
    %v153 = vmax.f32 %v151, 0.0
    %v154 = vld [vmem:[#allocation8] sm:$0xff]
    %v155 = vld [vmem:[#allocation8 + $0x8] sm:$0xff]
    %v156 = vld [vmem:[#allocation8 + $0x10] sm:$0xff]
    %v157 = vld [vmem:[#allocation8 + $0x18] sm:$0xff]
    %v158 = vld [vmem:[#allocation8 + $0x20] sm:$0xff]
    %v159 = vld [vmem:[#allocation8 + $0x28] sm:$0xff]
    %v160 = vld [vmem:[#allocation8 + $0x30] sm:$0xff]
    %v161 = vld [vmem:[#allocation8 + $0x38] sm:$0xff]
    %v162 = vld [vmem:[#allocation8 + $0x40] sm:$0xff]
    %v163 = vld [vmem:[#allocation8 + $0x48] sm:$0xff]
    %v164 = vld [vmem:[#allocation8 + $0x50] sm:$0xff]
    %v165 = vld [vmem:[#allocation8 + $0x58] sm:$0xff]
    %v166 = vld [vmem:[#allocation8 + $0x60] sm:$0xff]
    %v167 = vld [vmem:[#allocation8 + $0x68] sm:$0xff]
    %v168 = vld [vmem:[#allocation8 + $0x70] sm:$0xff]
    %v169 = vld [vmem:[#allocation8 + $0x78] sm:$0xff]
    %170 = vmatpush.msra.mxu0 %v169
    %171 = vmatpush.msra.mxu0 %v168
    %172 = vmatpush.msra.mxu0 %v167
    %173 = vmatpush.msra.mxu0 %v166
    %174 = vmatpush.msra.mxu0 %v165
    %175 = vmatpush.msra.mxu0 %v164
    %176 = vmatpush.msra.mxu0 %v163
    %177 = vmatpush.msra.mxu0 %v162
    %178 = vmatpush.msra.mxu0 %v161
    %179 = vmatpush.msra.mxu0 %v160
    %180 = vmatpush.msra.mxu0 %v159
    %181 = vmatpush.msra.mxu0 %v158
    %182 = vmatpush.msra.mxu0 %v157
    %183 = vmatpush.msra.mxu0 %v156
    %184 = vmatpush.msra.mxu0 %v155
    %185 = vmatpush.msra.mxu0 %v154
    %186 = vmatmul.f32.gmra.mxu0 %v153
    %v187 = vpop.f32.mrf.mxu0
    %v188 = vadd.f32 0.0, %v187
    %189 = vdwg.mxu0
    %190 = vst [vmem:[#allocation10] sm:$0xff] %v188
    // Predicated region
    $region34: #{tpu_custom_call.1} parent=1 // pred_check
      _
    $region35: #{tpu_custom_call.1} parent=1 // pred_check_branch
      %192 = sbr.rel (0) target = $region37
    $region36: #{tpu_custom_call.1} parent=1 // pred_region
      %194 = vsyncadd [#allocation4], 0
      %s196 = sshll.u32 [#allocation10], 4
      %s197 = int_to_ptr.vmem [resolvable:$true] %s196
      %s198 = sshll.u32 %s4, 4
      %s199 = int_to_ptr.hbm [resolvable:$true] %s198
      %201 = dma.vmem_to_hbm [thread:$0]  %s197, 128, %s199, [#allocation4]
    $region37: #{tpu_custom_call.1} parent=1 // pred_fallthru
      _
    // Predicated region
    $region38: #{tpu_custom_call.1} parent=1 // pred_check
      _
    $region39: #{tpu_custom_call.1} parent=1 // pred_check_branch
      %203 = sbr.rel (0) target = $region41
    $region40: #{tpu_custom_call.1} parent=1 // pred_region
      %205 = dma.done [#allocation4], 128
    $region41: #{tpu_custom_call.1} parent=1 // pred_fallthru
      _
    %206 = vsyncpa [#allocation3], 1
    %207 = vsyncpa [#allocation6], 1
    %208 = vsyncpa [#allocation9], 1
    %209 = vsyncpa [#allocation4], 1

</llo_original>
